<compile_context>
chip_gen: v7x
topology: tpu7x:2x2x1
jax: 0.10.0
libtpu: 0.0.40
codegen_flags: <defaults>
</compile_context>

<pallas_src>
import functools

import jax
import jax.numpy as jnp
from jax import lax
from jax.experimental import pallas as pl
from jax.experimental.pallas import tpu as pltpu

EMB_NUM = 2709   # nn.Embedding(2709, 1433) from the reference module
EMB_DIM = 1433
EPS = 1e-8

MAX_TILE_ROWS = 1024          # multiple of 32 -> legal sublane block for f32 and bf16
_LANE = 128
_MIB = 1024 * 1024


def _cosine_partial_kernel(emb_ref, pred_ref, out_ref, *, rows, tile_rows, use_abs):
    """One row-block: write the sum of cosine similarities of its valid rows.

    emb_ref  : (TR, D) bf16 class embeddings of argmax(true); masked rows pre-zeroed.
    pred_ref : (TR, D) f32 model prediction rows.
    out_ref  : (1, 8, 128) f32 per-block partial sum (same scalar splatted everywhere).
    """
    i = pl.program_id(0)

    emb = emb_ref[...].astype(jnp.float32)
    pred = pred_ref[...]
    if use_abs:                      # torch.abs folded into the kernel (X branch only)
        pred = jnp.abs(pred)
    pred = pred.astype(jnp.float32)

    # Single pass over the full-width data: two squared norms + one dot product.
    # Algebraically equivalent (to f32 tolerance) to the reference
    # F.cosine_similarity(emb/(||emb||+eps), pred/(||pred||+eps)).
    ne = jnp.sqrt(jnp.sum(emb * emb, axis=-1, keepdims=True))      # ||emb||
    npr = jnp.sqrt(jnp.sum(pred * pred, axis=-1, keepdims=True))   # ||pred||
    dot = jnp.sum(emb * pred, axis=-1, keepdims=True)              # emb . pred

    denom = (ne + EPS) * (npr + EPS)
    ab_dot = dot / denom                      # <emb/(||emb||+eps), pred/(||pred||+eps)>
    na_nb = (ne * npr) / denom                # ||a|| * ||b||
    cos = ab_dot / jnp.maximum(na_nb, EPS)    # (TR, 1)

    # Masked rows were zeroed in glue -> dot == 0 -> cos == 0 exactly.
    # Ragged-tail rows (>= rows) of the padded last block hold unspecified VMEM data
    # (possibly NaN/Inf), so exclude them with an iota-vs-row-count select.
    row_ids = i * tile_rows + lax.broadcasted_iota(jnp.int32, (tile_rows, 1), 0)
    contrib = jnp.where(row_ids < rows, cos, 0.0)

    out_ref[...] = jnp.broadcast_to(jnp.sum(contrib), out_ref.shape).astype(jnp.float32)


def _masked_cosine_sum(emb_bf16, pred, *, use_abs):
    """Sum of per-row cosine similarities (rows with zeroed emb contribute 0)."""
    rows, d = pred.shape

    # Tiny inputs: pad rows up to 8 (padded rows are excluded by the in-kernel check).
    if rows < 8:
        pad = 8 - rows
        emb_bf16 = jnp.pad(emb_bf16, ((0, pad), (0, 0)))
        pred = jnp.pad(pred, ((0, pad), (0, 0)))
        arr_rows = 8
    else:
        arr_rows = rows

    if arr_rows <= MAX_TILE_ROWS:
        tr = arr_rows            # single full-extent block: always a legal block shape
    else:
        tr = MAX_TILE_ROWS       # multiple of 32: legal for both f32 and bf16 tiling
    nb = pl.cdiv(arr_rows, tr)

    # VMEM budget derived from the real footprint: 2 streamed inputs x default
    # double-buffering, plus headroom for the tiny outputs and Mosaic scratch.
    lane_d = ((d + _LANE - 1) // _LANE) * _LANE
    vmem_limit = (2 * tr * lane_d * pred.dtype.itemsize
                  + 2 * tr * lane_d * emb_bf16.dtype.itemsize
                  + 16 * _MIB)

    kernel = functools.partial(_cosine_partial_kernel, rows=rows, tile_rows=tr,
                               use_abs=use_abs)
    partials = pl.pallas_call(
        kernel,
        out_shape=jax.ShapeDtypeStruct((nb, 8, 128), jnp.float32),
        grid_spec=pltpu.PrefetchScalarGridSpec(
            num_scalar_prefetch=0,
            grid=(nb,),
            in_specs=[
                pl.BlockSpec((tr, d), lambda i: (i, 0)),
                pl.BlockSpec((tr, d), lambda i: (i, 0)),
            ],
            out_specs=pl.BlockSpec((1, 8, 128), lambda i: (i, 0, 0)),
        ),
        compiler_params=pltpu.CompilerParams(
            dimension_semantics=("parallel",),      # per-block partials -> both TCs on v7x
            vmem_limit_bytes=int(vmem_limit),
        ),
    )(emb_bf16, pred)
    return jnp.sum(partials[:, 0, 0])


@functools.partial(jax.jit, static_argnames=("lambda0",))
def train_loss_discrete(masked_pred_X, masked_pred_E, true_X, true_E,
                        emb_table, *, lambda0):
    """JAX/Pallas equivalent of TrainLossDiscrete.forward."""
    dx = true_X.shape[-1]
    de = true_E.shape[-1]

    t_x = true_X.reshape(-1, dx)
    t_e = true_E.reshape(-1, de)
    p_x = masked_pred_X.reshape(-1, dx)   # abs applied inside the kernel (no HBM copy)
    p_e = masked_pred_E.reshape(-1, de)   # pure reshape, no copy

    # One fused pass over each one-hot tensor: row mask, class index, valid-row count.
    # The full-width one-hot `true` tensors never enter the Pallas kernel.
    mask_x = jnp.any(t_x != 0, axis=-1)
    mask_e = jnp.any(t_e != 0, axis=-1)
    cnt_x = jnp.sum(mask_x.astype(jnp.float32))
    cnt_e = jnp.sum(mask_e.astype(jnp.float32))
    idx_x = jnp.argmax(t_x, axis=-1)
    idx_e = jnp.argmax(t_e, axis=-1)

    # class_embeddings(argmax(true)) gathered in glue and streamed to the kernel as
    # bf16 (halves emb HBM traffic; all norm/dot accumulation stays f32 in-kernel).
    # Masked rows zeroed -> their cosine is exactly 0 and cnt_* excludes them, so the
    # result equals the reference mean over selected rows.
    # TODO(synk): fusing this gather into the kernel (table resident in VMEM +
    # scalar-prefetched indices) would remove the emb write + re-read, but Mosaic has
    # no vectorized row-gather; a per-row dynamic-slice loop costs more TC time than
    # the DMA it saves, so the gather stays in XLA.
    emb_tbl_bf16 = emb_table.astype(jnp.bfloat16)
    emb_x = jnp.where(mask_x[:, None], jnp.take(emb_tbl_bf16, idx_x, axis=0), 0.0)
    emb_e = jnp.where(mask_e[:, None], jnp.take(emb_tbl_bf16, idx_e, axis=0), 0.0)

    # TODO(synk): euclidean_distance is computed but unused in the reference; skipped.

    s_x = _masked_cosine_sum(emb_x, p_x, use_abs=True)
    s_e = _masked_cosine_sum(emb_e, p_e, use_abs=False)

    # cnt == 0 (every row masked) gives 0/0 = NaN, matching torch's mean over empty.
    loss_x = 1.0 - s_x / cnt_x
    loss_e = 1.0 - s_e / cnt_e
    return loss_x + lambda0 * loss_e


def _reference_loss(masked_pred_X, masked_pred_E, true_X, true_E, emb_table, lambda0):
    """Pure-JAX transcription of the PyTorch module (sanity check only)."""
    def cosine_loss(pred, true):
        eps = 1e-8
        n_p = jnp.linalg.norm(pred, axis=-1, keepdims=True)
        n_t = jnp.linalg.norm(true, axis=-1, keepdims=True)
        a = pred / (n_p + eps)
        b = true / (n_t + eps)
        cos = jnp.sum(a * b, axis=-1) / jnp.maximum(
            jnp.linalg.norm(a, axis=-1) * jnp.linalg.norm(b, axis=-1), eps)
        return 1.0 - jnp.mean(cos)

    t_x = true_X.reshape(-1, true_X.shape[-1])
    t_e = true_E.reshape(-1, true_E.shape[-1])
    p_x = jnp.abs(masked_pred_X.reshape(-1, masked_pred_X.shape[-1]))
    p_e = masked_pred_E.reshape(-1, masked_pred_E.shape[-1])
    m_x = jnp.any(t_x != 0, axis=-1)
    m_e = jnp.any(t_e != 0, axis=-1)
    ft_x, fp_x = t_x[m_x], p_x[m_x]
    ft_e, fp_e = t_e[m_e], p_e[m_e]
    emb_x = jnp.take(emb_table, jnp.argmax(ft_x, axis=-1), axis=0)
    emb_e = jnp.take(emb_table, jnp.argmax(ft_e, axis=-1), axis=0)
    return cosine_loss(emb_x, fp_x) + lambda0 * cosine_loss(emb_e, fp_e)


if __name__ == "__main__":
    key = jax.random.PRNGKey(0)
    k_emb, k_px, k_pe, k_cx, k_ce, k_mx, k_me = jax.random.split(key, 7)

    bs, n = 2, 3
    dx = de = EMB_DIM  # must equal embedding width for the reference code to be valid

    # deterministic "nn.Embedding(2709, 1433)" weight init (standard normal)
    emb_table = jax.random.normal(k_emb, (EMB_NUM, EMB_DIM), dtype=jnp.float32)

    # predictions
    masked_pred_X = jax.random.normal(k_px, (bs, n, dx), dtype=jnp.float32)
    masked_pred_E = jax.random.normal(k_pe, (bs, n, n, de), dtype=jnp.float32)

    # one-hot ground truths, with some rows zeroed out (masked rows)
    cls_x = jax.random.randint(k_cx, (bs, n), 0, dx)
    cls_e = jax.random.randint(k_ce, (bs, n, n), 0, de)
    true_X = jax.nn.one_hot(cls_x, dx, dtype=jnp.float32)
    true_E = jax.nn.one_hot(cls_e, de, dtype=jnp.float32)
    keep_x = jax.random.bernoulli(k_mx, 0.75, (bs, n)).astype(jnp.float32)
    keep_e = jax.random.bernoulli(k_me, 0.75, (bs, n, n)).astype(jnp.float32)
    true_X = true_X * keep_x[..., None]
    true_E = true_E * keep_e[..., None]

    lambda_train = (5.0,)  # self.lambda_train
    loss = train_loss_discrete(masked_pred_X, masked_pred_E, true_X, true_E,
                               emb_table, lambda0=lambda_train[0])
    loss = jax.block_until_ready(loss)
    assert jnp.isfinite(loss), "loss is not finite"

    ref = _reference_loss(masked_pred_X, masked_pred_E, true_X, true_E,
                          emb_table, lambda_train[0])
    ref = jax.block_until_ready(ref)
    assert abs(float(loss) - float(ref)) <= 2e-3 * max(1.0, abs(float(ref))), \
        f"mismatch: kernel={float(loss)} ref={float(ref)}"
    print("KERNEL_OK")
</pallas_src>

<mosaic_0001>
module attributes {stable_mosaic.version = 11 : i64} {
  func.func @_cosine_partial_kernel(%arg0: i32, %arg1: memref<8x1433xbf16, #tpu.memory_space<vmem>>, %arg2: memref<8x1433xf32, #tpu.memory_space<vmem>>, %arg3: memref<1x8x128xf32, #tpu.memory_space<vmem>>) attributes {dimension_semantics = [#tpu.dimension_semantics<parallel>], iteration_bounds = array<i64: 1>, scalar_prefetch = 0 : i64, scratch_operands = 0 : i64, tpu.core_type = #tpu.core_type<tc>, window_params = [{transform_indices = @transform_0, window_bounds = array<i64: 8, 1433>}, {transform_indices = @transform_1, window_bounds = array<i64: 8, 1433>}, {transform_indices = @transform_2, window_bounds = array<i64: 1, 8, 128>}]} {
    %c0 = arith.constant 0 : index
    %c0_0 = arith.constant 0 : index
    %0 = vector.load %arg1[%c0, %c0_0] : memref<8x1433xbf16, #tpu.memory_space<vmem>>, vector<8x1433xbf16>
    %1 = arith.extf %0 : vector<8x1433xbf16> to vector<8x1433xf32>
    %c0_1 = arith.constant 0 : index
    %c0_2 = arith.constant 0 : index
    %2 = vector.load %arg2[%c0_1, %c0_2] : memref<8x1433xf32, #tpu.memory_space<vmem>>, vector<8x1433xf32>
    %3 = math.absf %2 : vector<8x1433xf32>
    %4 = arith.mulf %1, %1 : vector<8x1433xf32>
    %cst = arith.constant dense<0.000000e+00> : vector<8xf32>
    %5 = vector.multi_reduction <add>, %4, %cst [1] : vector<8x1433xf32> to vector<8xf32>
    %6 = vector.shape_cast %5 : vector<8xf32> to vector<8x1xf32>
    %7 = math.sqrt %6 : vector<8x1xf32>
    %8 = arith.mulf %3, %3 : vector<8x1433xf32>
    %cst_3 = arith.constant dense<0.000000e+00> : vector<8xf32>
    %9 = vector.multi_reduction <add>, %8, %cst_3 [1] : vector<8x1433xf32> to vector<8xf32>
    %10 = vector.shape_cast %9 : vector<8xf32> to vector<8x1xf32>
    %11 = math.sqrt %10 : vector<8x1xf32>
    %12 = arith.mulf %1, %3 : vector<8x1433xf32>
    %cst_4 = arith.constant dense<0.000000e+00> : vector<8xf32>
    %13 = vector.multi_reduction <add>, %12, %cst_4 [1] : vector<8x1433xf32> to vector<8xf32>
    %14 = vector.shape_cast %13 : vector<8xf32> to vector<8x1xf32>
    %cst_5 = arith.constant 9.99999993E-9 : f32
    %15 = vector.broadcast %cst_5 : f32 to vector<8x1xf32>
    %16 = arith.addf %7, %15 : vector<8x1xf32>
    %cst_6 = arith.constant 9.99999993E-9 : f32
    %17 = vector.broadcast %cst_6 : f32 to vector<8x1xf32>
    %18 = arith.addf %11, %17 : vector<8x1xf32>
    %19 = arith.mulf %16, %18 : vector<8x1xf32>
    %20 = arith.divf %14, %19 : vector<8x1xf32>
    %21 = arith.mulf %7, %11 : vector<8x1xf32>
    %22 = arith.divf %21, %19 : vector<8x1xf32>
    %cst_7 = arith.constant 9.99999993E-9 : f32
    %23 = vector.broadcast %cst_7 : f32 to vector<8x1xf32>
    %24 = arith.maximumf %22, %23 : vector<8x1xf32>
    %25 = arith.divf %20, %24 : vector<8x1xf32>
    %c8_i32 = arith.constant 8 : i32
    %26 = arith.muli %arg0, %c8_i32 : i32
    %27 = tpu.iota {dimensions = array<i32: 0>} : vector<8x1xi32>
    %28 = vector.broadcast %26 : i32 to vector<8x1xi32>
    %29 = arith.addi %28, %27 : vector<8x1xi32>
    %c6_i32 = arith.constant 6 : i32
    %30 = vector.broadcast %c6_i32 : i32 to vector<8x1xi32>
    %31 = arith.cmpi slt, %29, %30 : vector<8x1xi32>
    %cst_8 = arith.constant 0.000000e+00 : f32
    %32 = vector.broadcast %cst_8 : f32 to vector<8x1xf32>
    %33 = arith.select %31, %25, %32 : vector<8x1xi1>, vector<8x1xf32>
    %34 = vector.shape_cast %33 : vector<8x1xf32> to vector<1x8x1xf32>
    %cst_9 = arith.constant dense<0.000000e+00> : vector<1xf32>
    %35 = vector.multi_reduction <add>, %34, %cst_9 [1, 2] : vector<1x8x1xf32> to vector<1xf32>
    %36 = vector.shape_cast %35 : vector<1xf32> to vector<1x1x1xf32>
    %37 = vector.extract %36[0, 0, 0] : f32 from vector<1x1x1xf32>
    %38 = vector.broadcast %37 : f32 to vector<1x8x128xf32>
    %c0_10 = arith.constant 0 : index
    %c0_11 = arith.constant 0 : index
    %c0_12 = arith.constant 0 : index
    %39 = vector.load %arg3[%c0_10, %c0_11, %c0_12] : memref<1x8x128xf32, #tpu.memory_space<vmem>>, vector<1x8x128xf32>
    tpu.vector_store %arg3[%c0_10, %c0_11, %c0_12], %38 {strides = array<i32>} : memref<1x8x128xf32, #tpu.memory_space<vmem>>, vector<1x8x128xf32>,
    return
  }
  func.func @transform_0(%arg0: i32) -> (i32, i32) {
    %c0_i32 = arith.constant 0 : i32
    %c0_i32_0 = arith.constant 0 : i32
    return %arg0, %c0_i32 : i32, i32
  }
  func.func @transform_1(%arg0: i32) -> (i32, i32) {
    %c0_i32 = arith.constant 0 : i32
    %c0_i32_0 = arith.constant 0 : i32
    return %arg0, %c0_i32 : i32, i32
  }
  func.func @transform_2(%arg0: i32) -> (i32, i32, i32) {
    %c0_i32 = arith.constant 0 : i32
    %c0_i32_0 = arith.constant 0 : i32
    %c0_i32_1 = arith.constant 0 : i32
    return %arg0, %c0_i32, %c0_i32_0 : i32, i32, i32
  }
}

module attributes {stable_mosaic.version = 11 : i64} {
  func.func @_cosine_partial_kernel(%arg0: i32, %arg1: memref<18x1433xbf16, #tpu.memory_space<vmem>>, %arg2: memref<18x1433xf32, #tpu.memory_space<vmem>>, %arg3: memref<1x8x128xf32, #tpu.memory_space<vmem>>) attributes {dimension_semantics = [#tpu.dimension_semantics<parallel>], iteration_bounds = array<i64: 1>, scalar_prefetch = 0 : i64, scratch_operands = 0 : i64, tpu.core_type = #tpu.core_type<tc>, window_params = [{transform_indices = @transform_0, window_bounds = array<i64: 18, 1433>}, {transform_indices = @transform_1, window_bounds = array<i64: 18, 1433>}, {transform_indices = @transform_2, window_bounds = array<i64: 1, 8, 128>}]} {
    %c0 = arith.constant 0 : index
    %c0_0 = arith.constant 0 : index
    %0 = vector.load %arg1[%c0, %c0_0] : memref<18x1433xbf16, #tpu.memory_space<vmem>>, vector<18x1433xbf16>
    %1 = arith.extf %0 : vector<18x1433xbf16> to vector<18x1433xf32>
    %c0_1 = arith.constant 0 : index
    %c0_2 = arith.constant 0 : index
    %2 = vector.load %arg2[%c0_1, %c0_2] : memref<18x1433xf32, #tpu.memory_space<vmem>>, vector<18x1433xf32>
    %3 = arith.mulf %1, %1 : vector<18x1433xf32>
    %cst = arith.constant dense<0.000000e+00> : vector<18xf32>
    %4 = vector.multi_reduction <add>, %3, %cst [1] : vector<18x1433xf32> to vector<18xf32>
    %5 = vector.shape_cast %4 : vector<18xf32> to vector<18x1xf32>
    %6 = math.sqrt %5 : vector<18x1xf32>
    %7 = arith.mulf %2, %2 : vector<18x1433xf32>
    %cst_3 = arith.constant dense<0.000000e+00> : vector<18xf32>
    %8 = vector.multi_reduction <add>, %7, %cst_3 [1] : vector<18x1433xf32> to vector<18xf32>
    %9 = vector.shape_cast %8 : vector<18xf32> to vector<18x1xf32>
    %10 = math.sqrt %9 : vector<18x1xf32>
    %11 = arith.mulf %1, %2 : vector<18x1433xf32>
    %cst_4 = arith.constant dense<0.000000e+00> : vector<18xf32>
    %12 = vector.multi_reduction <add>, %11, %cst_4 [1] : vector<18x1433xf32> to vector<18xf32>
    %13 = vector.shape_cast %12 : vector<18xf32> to vector<18x1xf32>
    %cst_5 = arith.constant 9.99999993E-9 : f32
    %14 = vector.broadcast %cst_5 : f32 to vector<18x1xf32>
    %15 = arith.addf %6, %14 : vector<18x1xf32>
    %cst_6 = arith.constant 9.99999993E-9 : f32
    %16 = vector.broadcast %cst_6 : f32 to vector<18x1xf32>
    %17 = arith.addf %10, %16 : vector<18x1xf32>
    %18 = arith.mulf %15, %17 : vector<18x1xf32>
    %19 = arith.divf %13, %18 : vector<18x1xf32>
    %20 = arith.mulf %6, %10 : vector<18x1xf32>
    %21 = arith.divf %20, %18 : vector<18x1xf32>
    %cst_7 = arith.constant 9.99999993E-9 : f32
    %22 = vector.broadcast %cst_7 : f32 to vector<18x1xf32>
    %23 = arith.maximumf %21, %22 : vector<18x1xf32>
    %24 = arith.divf %19, %23 : vector<18x1xf32>
    %c18_i32 = arith.constant 18 : i32
    %25 = arith.muli %arg0, %c18_i32 : i32
    %26 = tpu.iota {dimensions = array<i32: 0>} : vector<18x1xi32>
    %27 = vector.broadcast %25 : i32 to vector<18x1xi32>
    %28 = arith.addi %27, %26 : vector<18x1xi32>
    %c18_i32_8 = arith.constant 18 : i32
    %29 = vector.broadcast %c18_i32_8 : i32 to vector<18x1xi32>
    %30 = arith.cmpi slt, %28, %29 : vector<18x1xi32>
    %cst_9 = arith.constant 0.000000e+00 : f32
    %31 = vector.broadcast %cst_9 : f32 to vector<18x1xf32>
    %32 = arith.select %30, %24, %31 : vector<18x1xi1>, vector<18x1xf32>
    %33 = vector.shape_cast %32 : vector<18x1xf32> to vector<1x18x1xf32>
    %cst_10 = arith.constant dense<0.000000e+00> : vector<1xf32>
    %34 = vector.multi_reduction <add>, %33, %cst_10 [1, 2] : vector<1x18x1xf32> to vector<1xf32>
    %35 = vector.shape_cast %34 : vector<1xf32> to vector<1x1x1xf32>
    %36 = vector.extract %35[0, 0, 0] : f32 from vector<1x1x1xf32>
    %37 = vector.broadcast %36 : f32 to vector<1x8x128xf32>
    %c0_11 = arith.constant 0 : index
    %c0_12 = arith.constant 0 : index
    %c0_13 = arith.constant 0 : index
    %38 = vector.load %arg3[%c0_11, %c0_12, %c0_13] : memref<1x8x128xf32, #tpu.memory_space<vmem>>, vector<1x8x128xf32>
    tpu.vector_store %arg3[%c0_11, %c0_12, %c0_13], %37 {strides = array<i32>} : memref<1x8x128xf32, #tpu.memory_space<vmem>>, vector<1x8x128xf32>,
    return
  }
  func.func @transform_0(%arg0: i32) -> (i32, i32) {
    %c0_i32 = arith.constant 0 : i32
    %c0_i32_0 = arith.constant 0 : i32
    return %arg0, %c0_i32 : i32, i32
  }
  func.func @transform_1(%arg0: i32) -> (i32, i32) {
    %c0_i32 = arith.constant 0 : i32
    %c0_i32_0 = arith.constant 0 : i32
    return %arg0, %c0_i32 : i32, i32
  }
  func.func @transform_2(%arg0: i32) -> (i32, i32, i32) {
    %c0_i32 = arith.constant 0 : i32
    %c0_i32_0 = arith.constant 0 : i32
    %c0_i32_1 = arith.constant 0 : i32
    return %arg0, %c0_i32, %c0_i32_0 : i32, i32, i32
  }
}

</mosaic_0001>

<llo_original>
// kernel: train_loss_discrete.2
$region0: #{train_loss_discrete.2}
  #allocation0 [shape = 'u32[]', space=smem, size = 0x4, offset = 0x4, fixed_abs, tag = 'smem constant byte address 0x4 - core index']
  #allocation1 [shape = 'u32[144,128]{1,0:T(1,128)}', space=vmem, size = 0x12000, scoped, tag = 'internal scratch']
  %s0 = inlined_call_operand.vmem [shape: bf16[8,1433], index: 0, kind: input, shape index: {}]
  %s1 = inlined_call_operand.vmem [shape: f32[8,1433], index: 1, kind: input, shape index: {}]
  %s2 = inlined_call_operand.vmem [shape: f32[1,8,128], index: 2, kind: output, shape index: {}]
  %s3 = sld [smem:[#allocation0]]
  $region18: #{train_loss_discrete.2} parent=0
    _
  %s5 = ssub.s32 1, %s3
  %s6 = scalar_select 0, %s5, %s3
  // Predicated region
  $region2: #{train_loss_discrete.2} parent=0 // pred_check
    _
  $region3: #{train_loss_discrete.2} parent=0 // pred_check_branch
    %8 = sbr.rel (0) target = $region5
  $region4: #{train_loss_discrete.2} parent=0 // pred_region
    _
  $region5: #{train_loss_discrete.2} parent=0 // pred_fallthru
    _
  // Predicated region
  $region6: #{train_loss_discrete.2} parent=0 // pred_check
    _
  $region7: #{train_loss_discrete.2} parent=0 // pred_check_branch
    %10 = sbr.rel (0) target = $region9
  $region8: #{train_loss_discrete.2} parent=0 // pred_region
    _
  $region9: #{train_loss_discrete.2} parent=0 // pred_fallthru
    _
  %v11 = vld [vmem:[%s0] sm:$0xff]
  %v12 = vld [vmem:[%s0 + $0x8] sm:$0xff]
  %v13 = vld [vmem:[%s0 + $0x10] sm:$0xff]
  %v14 = vld [vmem:[%s0 + $0x18] sm:$0xff]
  %v15 = vld [vmem:[%s0 + $0x20] sm:$0xff]
  %v16 = vld [vmem:[%s0 + $0x28] sm:$0xff]
  %v17 = vunpack.c.l.bf16 %v11
  %v18 = vunpack.c.h.bf16 %v11
  %v19 = vunpack.c.l.bf16 %v12
  %v20 = vunpack.c.h.bf16 %v12
  %v21 = vunpack.c.l.bf16 %v13
  %v22 = vunpack.c.h.bf16 %v13
  %v23 = vunpack.c.l.bf16 %v14
  %v24 = vunpack.c.h.bf16 %v14
  %v25 = vunpack.c.l.bf16 %v15
  %v26 = vunpack.c.h.bf16 %v15
  %v27 = vunpack.c.l.bf16 %v16
  %v28 = vunpack.c.h.bf16 %v16
  %v29 = vld [vmem:[%s1] sm:$0xff]
  %v30 = vld [vmem:[%s1 + $0x8] sm:$0xff]
  %v31 = vld [vmem:[%s1 + $0x10] sm:$0xff]
  %v32 = vld [vmem:[%s1 + $0x18] sm:$0xff]
  %v33 = vld [vmem:[%s1 + $0x20] sm:$0xff]
  %v34 = vld [vmem:[%s1 + $0x28] sm:$0xff]
  %v35 = vld [vmem:[%s1 + $0x30] sm:$0xff]
  %v36 = vld [vmem:[%s1 + $0x38] sm:$0xff]
  %v37 = vld [vmem:[%s1 + $0x40] sm:$0xff]
  %v38 = vld [vmem:[%s1 + $0x48] sm:$0xff]
  %v39 = vld [vmem:[%s1 + $0x50] sm:$0xff]
  %v40 = vld [vmem:[%s1 + $0x58] sm:$0xff]
  %v41 = vand.u32 2147483647, %v29
  %v42 = vand.u32 2147483647, %v30
  %v43 = vand.u32 2147483647, %v31
  %v44 = vand.u32 2147483647, %v32
  %v45 = vand.u32 2147483647, %v33
  %v46 = vand.u32 2147483647, %v34
  %v47 = vand.u32 2147483647, %v35
  %v48 = vand.u32 2147483647, %v36
  %v49 = vand.u32 2147483647, %v37
  %v50 = vand.u32 2147483647, %v38
  %v51 = vand.u32 2147483647, %v39
  %v52 = vand.u32 2147483647, %v40
  %v53 = vmul.f32 %v17, %v17
  %v54 = vmul.f32 %v18, %v18
  %v55 = vmul.f32 %v19, %v19
  %v56 = vmul.f32 %v20, %v20
  %v57 = vmul.f32 %v21, %v21
  %v58 = vmul.f32 %v22, %v22
  %v59 = vmul.f32 %v23, %v23
  %v60 = vmul.f32 %v24, %v24
  %v61 = vmul.f32 %v25, %v25
  %v62 = vmul.f32 %v26, %v26
  %v63 = vmul.f32 %v27, %v27
  %v64 = vmul.f32 %v28, %v28
  %v65 = vadd.f32 %v53, %v54
  %v66 = vadd.f32 %v65, %v55
  %v67 = vadd.f32 %v66, %v56
  %v68 = vadd.f32 %v67, %v57
  %v69 = vadd.f32 %v68, %v58
  %v70 = vadd.f32 %v69, %v59
  %v71 = vadd.f32 %v70, %v60
  %v72 = vadd.f32 %v71, %v61
  %v73 = vadd.f32 %v72, %v62
  %v74 = vadd.f32 %v73, %v63
  %vm75 = vcmask 203776
  %v76 = vsel %vm75, %v64, 0.0
  %v77 = vadd.f32 %v74, %v76
  %78 = vadd.xlane.f32.xlu0 %v77
  %v79 = vpop.xlane.xlu0 %78
  %v80 = vrsqrt.pop %v79
  %v81 = vmul.f32 %v79, %v80
  %vm82 = vcmp.eq.f32.partialorder %v79, inf
  %v83 = vsel %vm82, %v79, %v81
  %vm84 = vcmp.eq.f32.partialorder %v79, 0.0
  %v85 = vand.u32 %v79, 2147483648
  %v86 = vsel %vm84, %v85, %v83
  %v87 = vmul.f32 %v41, %v41
  %v88 = vmul.f32 %v42, %v42
  %v89 = vmul.f32 %v43, %v43
  %v90 = vmul.f32 %v44, %v44
  %v91 = vmul.f32 %v45, %v45
  %v92 = vmul.f32 %v46, %v46
  %v93 = vmul.f32 %v47, %v47
  %v94 = vmul.f32 %v48, %v48
  %v95 = vmul.f32 %v49, %v49
  %v96 = vmul.f32 %v50, %v50
  %v97 = vmul.f32 %v51, %v51
  %v98 = vmul.f32 %v52, %v52
  %v99 = vadd.f32 %v87, %v88
  %v100 = vadd.f32 %v99, %v89
  %v101 = vadd.f32 %v100, %v90
  %v102 = vadd.f32 %v101, %v91
  %v103 = vadd.f32 %v102, %v92
  %v104 = vadd.f32 %v103, %v93
  %v105 = vadd.f32 %v104, %v94
  %v106 = vadd.f32 %v105, %v95
  %v107 = vadd.f32 %v106, %v96
  %v108 = vadd.f32 %v107, %v97
  %v109 = vsel %vm75, %v98, 0.0
  %v110 = vadd.f32 %v108, %v109
  %111 = vadd.xlane.f32.xlu0 %v110
  %v112 = vpop.xlane.xlu0 %111
  %v113 = vrsqrt.pop %v112
  %v114 = vmul.f32 %v112, %v113
  %vm115 = vcmp.eq.f32.partialorder %v112, inf
  %v116 = vsel %vm115, %v112, %v114
  %vm117 = vcmp.eq.f32.partialorder %v112, 0.0
  %v118 = vand.u32 %v112, 2147483648
  %v119 = vsel %vm117, %v118, %v116
  %v120 = vmul.f32 %v17, %v41
  %v121 = vmul.f32 %v18, %v42
  %v122 = vmul.f32 %v19, %v43
  %v123 = vmul.f32 %v20, %v44
  %v124 = vmul.f32 %v21, %v45
  %v125 = vmul.f32 %v22, %v46
  %v126 = vmul.f32 %v23, %v47
  %v127 = vmul.f32 %v24, %v48
  %v128 = vmul.f32 %v25, %v49
  %v129 = vmul.f32 %v26, %v50
  %v130 = vmul.f32 %v27, %v51
  %v131 = vmul.f32 %v28, %v52
  %v132 = vadd.f32 %v120, %v121
  %v133 = vadd.f32 %v132, %v122
  %v134 = vadd.f32 %v133, %v123
  %v135 = vadd.f32 %v134, %v124
  %v136 = vadd.f32 %v135, %v125
  %v137 = vadd.f32 %v136, %v126
  %v138 = vadd.f32 %v137, %v127
  %v139 = vadd.f32 %v138, %v128
  %v140 = vadd.f32 %v139, %v129
  %v141 = vadd.f32 %v140, %v130
  %v142 = vsel %vm75, %v131, 0.0
  %v143 = vadd.f32 %v141, %v142
  %144 = vadd.xlane.f32.xlu0 %v143
  %v145 = vpop.xlane.xlu0 %144
  %v146 = vadd.f32 %v86, 1e-08
  %v147 = vadd.f32 %v119, 1e-08
  %v148 = vmul.f32 %v146, %v147
  %v149 = vrcp.pop %v148
  %v150 = vmul.f32 %v145, %v149
  %v151 = vmul.f32 %v86, %v119
  %v152 = vmul.f32 %v151, %v149
  %v153 = vmax.f32 %v152, 1e-08
  %v154 = vrcp.pop %v153
  %v155 = vmul.f32 %v150, %v154
  %s156 = smul.u32 0, 8
  %v157 = vlaneseq
  %v158 = vshrl.u32 %v157, 7
  %v159 = vstv %s156
  %v160 = vadd.s32 %v159, %v158
  %vm161 = vcmp.lt.s32.totalorder %v160, 6
  %v162 = vsel %vm161, %v155, 0.0
  %vm163 = vcmask 7168
  %v164 = vsel %vm163, %v162, 0.0
  %165 = vadd.xlane.f32.xlu0 %v164
  %v166 = vpop.xlane.xlu0 %165
  %v167 = vrot.slane %v166, 4
  %v168 = vadd.f32 %v166, %v167
  %v169 = vrot.slane %v168, 2
  %v170 = vadd.f32 %v168, %v169
  %v171 = vrot.slane %v170, 1
  %v172 = vadd.f32 %v170, %v171
  %s173 = vtos %v172
  %v174 = vstv %s173
  %175 = vst [vmem:[%s2] sm:$0xff] %v174
  // Predicated region
  $region10: #{train_loss_discrete.2} parent=0 // pred_check
    _
  $region11: #{train_loss_discrete.2} parent=0 // pred_check_branch
    %177 = sbr.rel (0) target = $region13
  $region12: #{train_loss_discrete.2} parent=0 // pred_region
    _
  $region13: #{train_loss_discrete.2} parent=0 // pred_fallthru
    _
  // Predicated region
  $region14: #{train_loss_discrete.2} parent=0 // pred_check
    _
  $region15: #{train_loss_discrete.2} parent=0 // pred_check_branch
    %179 = sbr.rel (0) target = $region17
  $region16: #{train_loss_discrete.2} parent=0 // pred_region
    _
  $region17: #{train_loss_discrete.2} parent=0 // pred_fallthru
    _

// kernel: train_loss_discrete.3
$region0: #{train_loss_discrete.3}
  #allocation0 [shape = 'u32[]', space=smem, size = 0x4, offset = 0x4, fixed_abs, tag = 'smem constant byte address 0x4 - core index']
  #allocation1 [shape = 'u32[144,128]{1,0:T(1,128)}', space=vmem, size = 0x12000, scoped, tag = 'internal scratch']
  %s0 = inlined_call_operand.vmem [shape: bf16[18,1433], index: 0, kind: input, shape index: {}]
  %s1 = inlined_call_operand.vmem [shape: f32[18,1433], index: 1, kind: input, shape index: {}]
  %s2 = inlined_call_operand.vmem [shape: f32[1,8,128], index: 2, kind: output, shape index: {}]
  %s3 = sld [smem:[#allocation0]]
  $region18: #{train_loss_discrete.3} parent=0
    _
  %s5 = ssub.s32 1, %s3
  %s6 = scalar_select 0, %s5, %s3
  // Predicated region
  $region2: #{train_loss_discrete.3} parent=0 // pred_check
    _
  $region3: #{train_loss_discrete.3} parent=0 // pred_check_branch
    %8 = sbr.rel (0) target = $region5
  $region4: #{train_loss_discrete.3} parent=0 // pred_region
    _
  $region5: #{train_loss_discrete.3} parent=0 // pred_fallthru
    _
  // Predicated region
  $region6: #{train_loss_discrete.3} parent=0 // pred_check
    _
  $region7: #{train_loss_discrete.3} parent=0 // pred_check_branch
    %10 = sbr.rel (0) target = $region9
  $region8: #{train_loss_discrete.3} parent=0 // pred_region
    _
  $region9: #{train_loss_discrete.3} parent=0 // pred_fallthru
    _
  %v11 = vld [vmem:[%s0] sm:$0xff]
  %v12 = vld [vmem:[%s0 + $0x8] sm:$0xff]
  %v13 = vld [vmem:[%s0 + $0x10] sm:$0xff]
  %v14 = vld [vmem:[%s0 + $0x18] sm:$0xff]
  %v15 = vld [vmem:[%s0 + $0x20] sm:$0xff]
  %v16 = vld [vmem:[%s0 + $0x28] sm:$0xff]
  %v17 = vld [vmem:[%s0 + $0x30] sm:$0xff]
  %v18 = vld [vmem:[%s0 + $0x38] sm:$0xff]
  %v19 = vld [vmem:[%s0 + $0x40] sm:$0xff]
  %v20 = vld [vmem:[%s0 + $0x48] sm:$0xff]
  %v21 = vld [vmem:[%s0 + $0x50] sm:$0xff]
  %v22 = vld [vmem:[%s0 + $0x58] sm:$0xff]
  %v23 = vld [vmem:[%s0 + $0x60] sm:$0x11]
  %v24 = vld [vmem:[%s0 + $0x68] sm:$0x11]
  %v25 = vld [vmem:[%s0 + $0x70] sm:$0x11]
  %v26 = vld [vmem:[%s0 + $0x78] sm:$0x11]
  %v27 = vld [vmem:[%s0 + $0x80] sm:$0x11]
  %v28 = vld [vmem:[%s0 + $0x88] sm:$0x11]
  %v29 = vunpack.c.l.bf16 %v11
  %v30 = vunpack.c.h.bf16 %v11
  %v31 = vunpack.c.l.bf16 %v12
  %v32 = vunpack.c.h.bf16 %v12
  %v33 = vunpack.c.l.bf16 %v13
  %v34 = vunpack.c.h.bf16 %v13
  %v35 = vunpack.c.l.bf16 %v14
  %v36 = vunpack.c.h.bf16 %v14
  %v37 = vunpack.c.l.bf16 %v15
  %v38 = vunpack.c.h.bf16 %v15
  %v39 = vunpack.c.l.bf16 %v16
  %v40 = vunpack.c.h.bf16 %v16
  %v41 = vunpack.c.l.bf16 %v17
  %v42 = vunpack.c.h.bf16 %v17
  %v43 = vunpack.c.l.bf16 %v18
  %v44 = vunpack.c.h.bf16 %v18
  %v45 = vunpack.c.l.bf16 %v19
  %v46 = vunpack.c.h.bf16 %v19
  %v47 = vunpack.c.l.bf16 %v20
  %v48 = vunpack.c.h.bf16 %v20
  %v49 = vunpack.c.l.bf16 %v21
  %v50 = vunpack.c.h.bf16 %v21
  %v51 = vunpack.c.l.bf16 %v22
  %v52 = vunpack.c.h.bf16 %v22
  %v53 = vunpack.c.l.bf16 %v23
  %v54 = vunpack.c.h.bf16 %v23
  %v55 = vunpack.c.l.bf16 %v24
  %v56 = vunpack.c.h.bf16 %v24
  %v57 = vunpack.c.l.bf16 %v25
  %v58 = vunpack.c.h.bf16 %v25
  %v59 = vunpack.c.l.bf16 %v26
  %v60 = vunpack.c.h.bf16 %v26
  %v61 = vunpack.c.l.bf16 %v27
  %v62 = vunpack.c.h.bf16 %v27
  %v63 = vunpack.c.l.bf16 %v28
  %v64 = vunpack.c.h.bf16 %v28
  %v65 = vld [vmem:[%s1] sm:$0xff]
  %v66 = vld [vmem:[%s1 + $0x8] sm:$0xff]
  %v67 = vld [vmem:[%s1 + $0x10] sm:$0xff]
  %v68 = vld [vmem:[%s1 + $0x18] sm:$0xff]
  %v69 = vld [vmem:[%s1 + $0x20] sm:$0xff]
  %v70 = vld [vmem:[%s1 + $0x28] sm:$0xff]
  %v71 = vld [vmem:[%s1 + $0x30] sm:$0xff]
  %v72 = vld [vmem:[%s1 + $0x38] sm:$0xff]
  %v73 = vld [vmem:[%s1 + $0x40] sm:$0xff]
  %v74 = vld [vmem:[%s1 + $0x48] sm:$0xff]
  %v75 = vld [vmem:[%s1 + $0x50] sm:$0xff]
  %v76 = vld [vmem:[%s1 + $0x58] sm:$0xff]
  %v77 = vld [vmem:[%s1 + $0x60] sm:$0xff]
  %v78 = vld [vmem:[%s1 + $0x68] sm:$0xff]
  %v79 = vld [vmem:[%s1 + $0x70] sm:$0xff]
  %v80 = vld [vmem:[%s1 + $0x78] sm:$0xff]
  %v81 = vld [vmem:[%s1 + $0x80] sm:$0xff]
  %v82 = vld [vmem:[%s1 + $0x88] sm:$0xff]
  %v83 = vld [vmem:[%s1 + $0x90] sm:$0xff]
  %v84 = vld [vmem:[%s1 + $0x98] sm:$0xff]
  %v85 = vld [vmem:[%s1 + $0xa0] sm:$0xff]
  %v86 = vld [vmem:[%s1 + $0xa8] sm:$0xff]
  %v87 = vld [vmem:[%s1 + $0xb0] sm:$0xff]
  %v88 = vld [vmem:[%s1 + $0xb8] sm:$0xff]
  %v89 = vld [vmem:[%s1 + $0xc0] sm:$0x3]
  %v90 = vld [vmem:[%s1 + $0xc8] sm:$0x3]
  %v91 = vld [vmem:[%s1 + $0xd0] sm:$0x3]
  %v92 = vld [vmem:[%s1 + $0xd8] sm:$0x3]
  %v93 = vld [vmem:[%s1 + $0xe0] sm:$0x3]
  %v94 = vld [vmem:[%s1 + $0xe8] sm:$0x3]
  %v95 = vld [vmem:[%s1 + $0xf0] sm:$0x3]
  %v96 = vld [vmem:[%s1 + $0xf8] sm:$0x3]
  %v97 = vld [vmem:[%s1 + $0x100] sm:$0x3]
  %v98 = vld [vmem:[%s1 + $0x108] sm:$0x3]
  %v99 = vld [vmem:[%s1 + $0x110] sm:$0x3]
  %v100 = vld [vmem:[%s1 + $0x118] sm:$0x3]
  %v101 = vmul.f32 %v29, %v29
  %v102 = vmul.f32 %v30, %v30
  %v103 = vmul.f32 %v31, %v31
  %v104 = vmul.f32 %v32, %v32
  %v105 = vmul.f32 %v33, %v33
  %v106 = vmul.f32 %v34, %v34
  %v107 = vmul.f32 %v35, %v35
  %v108 = vmul.f32 %v36, %v36
  %v109 = vmul.f32 %v37, %v37
  %v110 = vmul.f32 %v38, %v38
  %v111 = vmul.f32 %v39, %v39
  %v112 = vmul.f32 %v40, %v40
  %v113 = vmul.f32 %v41, %v41
  %v114 = vmul.f32 %v42, %v42
  %v115 = vmul.f32 %v43, %v43
  %v116 = vmul.f32 %v44, %v44
  %v117 = vmul.f32 %v45, %v45
  %v118 = vmul.f32 %v46, %v46
  %v119 = vmul.f32 %v47, %v47
  %v120 = vmul.f32 %v48, %v48
  %v121 = vmul.f32 %v49, %v49
  %v122 = vmul.f32 %v50, %v50
  %v123 = vmul.f32 %v51, %v51
  %v124 = vmul.f32 %v52, %v52
  %v125 = vmul.f32 %v53, %v53
  %v126 = vmul.f32 %v54, %v54
  %v127 = vmul.f32 %v55, %v55
  %v128 = vmul.f32 %v56, %v56
  %v129 = vmul.f32 %v57, %v57
  %v130 = vmul.f32 %v58, %v58
  %v131 = vmul.f32 %v59, %v59
  %v132 = vmul.f32 %v60, %v60
  %v133 = vmul.f32 %v61, %v61
  %v134 = vmul.f32 %v62, %v62
  %v135 = vmul.f32 %v63, %v63
  %v136 = vmul.f32 %v64, %v64
  %v137 = vadd.f32 %v101, %v102
  %v138 = vadd.f32 %v137, %v103
  %v139 = vadd.f32 %v138, %v104
  %v140 = vadd.f32 %v139, %v105
  %v141 = vadd.f32 %v140, %v106
  %v142 = vadd.f32 %v141, %v107
  %v143 = vadd.f32 %v142, %v108
  %v144 = vadd.f32 %v143, %v109
  %v145 = vadd.f32 %v144, %v110
  %v146 = vadd.f32 %v145, %v111
  %vm147 = vcmask 203776
  %v148 = vsel %vm147, %v112, 0.0
  %v149 = vadd.f32 %v146, %v148
  %150 = vadd.xlane.f32.xlu0 %v149
  %v151 = vpop.xlane.xlu0 %150
  %v152 = vadd.f32 %v113, %v114
  %v153 = vadd.f32 %v152, %v115
  %v154 = vadd.f32 %v153, %v116
  %v155 = vadd.f32 %v154, %v117
  %v156 = vadd.f32 %v155, %v118
  %v157 = vadd.f32 %v156, %v119
  %v158 = vadd.f32 %v157, %v120
  %v159 = vadd.f32 %v158, %v121
  %v160 = vadd.f32 %v159, %v122
  %v161 = vadd.f32 %v160, %v123
  %v162 = vsel %vm147, %v124, 0.0
  %v163 = vadd.f32 %v161, %v162
  %164 = vadd.xlane.f32.xlu0 %v163
  %v165 = vpop.xlane.xlu0 %164
  %vm166 = vcmask 1041408
  %v167 = vsel %vm166, %v125, 0.0
  %v168 = vsel %vm166, %v126, 0.0
  %v169 = vadd.f32 %v167, %v168
  %v170 = vsel %vm166, %v127, 0.0
  %v171 = vadd.f32 %v169, %v170
  %v172 = vsel %vm166, %v128, 0.0
  %v173 = vadd.f32 %v171, %v172
  %v174 = vsel %vm166, %v129, 0.0
  %v175 = vadd.f32 %v173, %v174
  %v176 = vsel %vm166, %v130, 0.0
  %v177 = vadd.f32 %v175, %v176
  %v178 = vsel %vm166, %v131, 0.0
  %v179 = vadd.f32 %v177, %v178
  %v180 = vsel %vm166, %v132, 0.0
  %v181 = vadd.f32 %v179, %v180
  %v182 = vsel %vm166, %v133, 0.0
  %v183 = vadd.f32 %v181, %v182
  %v184 = vsel %vm166, %v134, 0.0
  %v185 = vadd.f32 %v183, %v184
  %v186 = vsel %vm166, %v135, 0.0
  %v187 = vadd.f32 %v185, %v186
  %vm188 = vcmask 197632
  %v189 = vsel %vm188, %v136, 0.0
  %v190 = vadd.f32 %v187, %v189
  %191 = vadd.xlane.f32.xlu0 %v190
  %v192 = vpop.xlane.xlu0 %191
  %v193 = vrsqrt.pop %v151
  %v194 = vmul.f32 %v151, %v193
  %vm195 = vcmp.eq.f32.partialorder %v151, inf
  %v196 = vsel %vm195, %v151, %v194
  %vm197 = vcmp.eq.f32.partialorder %v151, 0.0
  %v198 = vand.u32 %v151, 2147483648
  %v199 = vsel %vm197, %v198, %v196
  %v200 = vrsqrt.pop %v165
  %v201 = vmul.f32 %v165, %v200
  %vm202 = vcmp.eq.f32.partialorder %v165, inf
  %v203 = vsel %vm202, %v165, %v201
  %vm204 = vcmp.eq.f32.partialorder %v165, 0.0
  %v205 = vand.u32 %v165, 2147483648
  %v206 = vsel %vm204, %v205, %v203
  %v207 = vrsqrt.pop %v192
  %v208 = vmul.f32 %v192, %v207
  %vm209 = vcmp.eq.f32.partialorder %v192, inf
  %v210 = vsel %vm209, %v192, %v208
  %vm211 = vcmp.eq.f32.partialorder %v192, 0.0
  %v212 = vand.u32 %v192, 2147483648
  %v213 = vsel %vm211, %v212, %v210
  %v214 = vmul.f32 %v65, %v65
  %v215 = vmul.f32 %v66, %v66
  %v216 = vmul.f32 %v67, %v67
  %v217 = vmul.f32 %v68, %v68
  %v218 = vmul.f32 %v69, %v69
  %v219 = vmul.f32 %v70, %v70
  %v220 = vmul.f32 %v71, %v71
  %v221 = vmul.f32 %v72, %v72
  %v222 = vmul.f32 %v73, %v73
  %v223 = vmul.f32 %v74, %v74
  %v224 = vmul.f32 %v75, %v75
  %v225 = vmul.f32 %v76, %v76
  %v226 = vmul.f32 %v77, %v77
  %v227 = vmul.f32 %v78, %v78
  %v228 = vmul.f32 %v79, %v79
  %v229 = vmul.f32 %v80, %v80
  %v230 = vmul.f32 %v81, %v81
  %v231 = vmul.f32 %v82, %v82
  %v232 = vmul.f32 %v83, %v83
  %v233 = vmul.f32 %v84, %v84
  %v234 = vmul.f32 %v85, %v85
  %v235 = vmul.f32 %v86, %v86
  %v236 = vmul.f32 %v87, %v87
  %v237 = vmul.f32 %v88, %v88
  %v238 = vmul.f32 %v89, %v89
  %v239 = vmul.f32 %v90, %v90
  %v240 = vmul.f32 %v91, %v91
  %v241 = vmul.f32 %v92, %v92
  %v242 = vmul.f32 %v93, %v93
  %v243 = vmul.f32 %v94, %v94
  %v244 = vmul.f32 %v95, %v95
  %v245 = vmul.f32 %v96, %v96
  %v246 = vmul.f32 %v97, %v97
  %v247 = vmul.f32 %v98, %v98
  %v248 = vmul.f32 %v99, %v99
  %v249 = vmul.f32 %v100, %v100
  %v250 = vadd.f32 %v214, %v215
  %v251 = vadd.f32 %v250, %v216
  %v252 = vadd.f32 %v251, %v217
  %v253 = vadd.f32 %v252, %v218
  %v254 = vadd.f32 %v253, %v219
  %v255 = vadd.f32 %v254, %v220
  %v256 = vadd.f32 %v255, %v221
  %v257 = vadd.f32 %v256, %v222
  %v258 = vadd.f32 %v257, %v223
  %v259 = vadd.f32 %v258, %v224
  %v260 = vsel %vm147, %v225, 0.0
  %v261 = vadd.f32 %v259, %v260
  %262 = vadd.xlane.f32.xlu0 %v261
  %v263 = vpop.xlane.xlu0 %262
  %v264 = vadd.f32 %v226, %v227
  %v265 = vadd.f32 %v264, %v228
  %v266 = vadd.f32 %v265, %v229
  %v267 = vadd.f32 %v266, %v230
  %v268 = vadd.f32 %v267, %v231
  %v269 = vadd.f32 %v268, %v232
  %v270 = vadd.f32 %v269, %v233
  %v271 = vadd.f32 %v270, %v234
  %v272 = vadd.f32 %v271, %v235
  %v273 = vadd.f32 %v272, %v236
  %v274 = vsel %vm147, %v237, 0.0
  %v275 = vadd.f32 %v273, %v274
  %276 = vadd.xlane.f32.xlu0 %v275
  %v277 = vpop.xlane.xlu0 %276
  %v278 = vsel %vm166, %v238, 0.0
  %v279 = vsel %vm166, %v239, 0.0
  %v280 = vadd.f32 %v278, %v279
  %v281 = vsel %vm166, %v240, 0.0
  %v282 = vadd.f32 %v280, %v281
  %v283 = vsel %vm166, %v241, 0.0
  %v284 = vadd.f32 %v282, %v283
  %v285 = vsel %vm166, %v242, 0.0
  %v286 = vadd.f32 %v284, %v285
  %v287 = vsel %vm166, %v243, 0.0
  %v288 = vadd.f32 %v286, %v287
  %v289 = vsel %vm166, %v244, 0.0
  %v290 = vadd.f32 %v288, %v289
  %v291 = vsel %vm166, %v245, 0.0
  %v292 = vadd.f32 %v290, %v291
  %v293 = vsel %vm166, %v246, 0.0
  %v294 = vadd.f32 %v292, %v293
  %v295 = vsel %vm166, %v247, 0.0
  %v296 = vadd.f32 %v294, %v295
  %v297 = vsel %vm166, %v248, 0.0
  %v298 = vadd.f32 %v296, %v297
  %v299 = vsel %vm188, %v249, 0.0
  %v300 = vadd.f32 %v298, %v299
  %301 = vadd.xlane.f32.xlu0 %v300
  %v302 = vpop.xlane.xlu0 %301
  %v303 = vrsqrt.pop %v263
  %v304 = vmul.f32 %v263, %v303
  %vm305 = vcmp.eq.f32.partialorder %v263, inf
  %v306 = vsel %vm305, %v263, %v304
  %vm307 = vcmp.eq.f32.partialorder %v263, 0.0
  %v308 = vand.u32 %v263, 2147483648
  %v309 = vsel %vm307, %v308, %v306
  %v310 = vrsqrt.pop %v277
  %v311 = vmul.f32 %v277, %v310
  %vm312 = vcmp.eq.f32.partialorder %v277, inf
  %v313 = vsel %vm312, %v277, %v311
  %vm314 = vcmp.eq.f32.partialorder %v277, 0.0
  %v315 = vand.u32 %v277, 2147483648
  %v316 = vsel %vm314, %v315, %v313
  %v317 = vrsqrt.pop %v302
  %v318 = vmul.f32 %v302, %v317
  %vm319 = vcmp.eq.f32.partialorder %v302, inf
  %v320 = vsel %vm319, %v302, %v318
  %vm321 = vcmp.eq.f32.partialorder %v302, 0.0
  %v322 = vand.u32 %v302, 2147483648
  %v323 = vsel %vm321, %v322, %v320
  %v324 = vmul.f32 %v29, %v65
  %v325 = vmul.f32 %v30, %v66
  %v326 = vmul.f32 %v31, %v67
  %v327 = vmul.f32 %v32, %v68
  %v328 = vmul.f32 %v33, %v69
  %v329 = vmul.f32 %v34, %v70
  %v330 = vmul.f32 %v35, %v71
  %v331 = vmul.f32 %v36, %v72
  %v332 = vmul.f32 %v37, %v73
  %v333 = vmul.f32 %v38, %v74
  %v334 = vmul.f32 %v39, %v75
  %v335 = vmul.f32 %v40, %v76
  %v336 = vmul.f32 %v41, %v77
  %v337 = vmul.f32 %v42, %v78
  %v338 = vmul.f32 %v43, %v79
  %v339 = vmul.f32 %v44, %v80
  %v340 = vmul.f32 %v45, %v81
  %v341 = vmul.f32 %v46, %v82
  %v342 = vmul.f32 %v47, %v83
  %v343 = vmul.f32 %v48, %v84
  %v344 = vmul.f32 %v49, %v85
  %v345 = vmul.f32 %v50, %v86
  %v346 = vmul.f32 %v51, %v87
  %v347 = vmul.f32 %v52, %v88
  %v348 = vmul.f32 %v53, %v89
  %v349 = vmul.f32 %v54, %v90
  %v350 = vmul.f32 %v55, %v91
  %v351 = vmul.f32 %v56, %v92
  %v352 = vmul.f32 %v57, %v93
  %v353 = vmul.f32 %v58, %v94
  %v354 = vmul.f32 %v59, %v95
  %v355 = vmul.f32 %v60, %v96
  %v356 = vmul.f32 %v61, %v97
  %v357 = vmul.f32 %v62, %v98
  %v358 = vmul.f32 %v63, %v99
  %v359 = vmul.f32 %v64, %v100
  %v360 = vadd.f32 %v324, %v325
  %v361 = vadd.f32 %v360, %v326
  %v362 = vadd.f32 %v361, %v327
  %v363 = vadd.f32 %v362, %v328
  %v364 = vadd.f32 %v363, %v329
  %v365 = vadd.f32 %v364, %v330
  %v366 = vadd.f32 %v365, %v331
  %v367 = vadd.f32 %v366, %v332
  %v368 = vadd.f32 %v367, %v333
  %v369 = vadd.f32 %v368, %v334
  %v370 = vsel %vm147, %v335, 0.0
  %v371 = vadd.f32 %v369, %v370
  %372 = vadd.xlane.f32.xlu0 %v371
  %v373 = vpop.xlane.xlu0 %372
  %v374 = vadd.f32 %v336, %v337
  %v375 = vadd.f32 %v374, %v338
  %v376 = vadd.f32 %v375, %v339
  %v377 = vadd.f32 %v376, %v340
  %v378 = vadd.f32 %v377, %v341
  %v379 = vadd.f32 %v378, %v342
  %v380 = vadd.f32 %v379, %v343
  %v381 = vadd.f32 %v380, %v344
  %v382 = vadd.f32 %v381, %v345
  %v383 = vadd.f32 %v382, %v346
  %v384 = vsel %vm147, %v347, 0.0
  %v385 = vadd.f32 %v383, %v384
  %386 = vadd.xlane.f32.xlu0 %v385
  %v387 = vpop.xlane.xlu0 %386
  %v388 = vsel %vm166, %v348, 0.0
  %v389 = vsel %vm166, %v349, 0.0
  %v390 = vadd.f32 %v388, %v389
  %v391 = vsel %vm166, %v350, 0.0
  %v392 = vadd.f32 %v390, %v391
  %v393 = vsel %vm166, %v351, 0.0
  %v394 = vadd.f32 %v392, %v393
  %v395 = vsel %vm166, %v352, 0.0
  %v396 = vadd.f32 %v394, %v395
  %v397 = vsel %vm166, %v353, 0.0
  %v398 = vadd.f32 %v396, %v397
  %v399 = vsel %vm166, %v354, 0.0
  %v400 = vadd.f32 %v398, %v399
  %v401 = vsel %vm166, %v355, 0.0
  %v402 = vadd.f32 %v400, %v401
  %v403 = vsel %vm166, %v356, 0.0
  %v404 = vadd.f32 %v402, %v403
  %v405 = vsel %vm166, %v357, 0.0
  %v406 = vadd.f32 %v404, %v405
  %v407 = vsel %vm166, %v358, 0.0
  %v408 = vadd.f32 %v406, %v407
  %v409 = vsel %vm188, %v359, 0.0
  %v410 = vadd.f32 %v408, %v409
  %411 = vadd.xlane.f32.xlu0 %v410
  %v412 = vpop.xlane.xlu0 %411
  %v413 = vadd.f32 %v199, 1e-08
  %v414 = vadd.f32 %v206, 1e-08
  %v415 = vadd.f32 %v213, 1e-08
  %v416 = vadd.f32 %v309, 1e-08
  %v417 = vadd.f32 %v316, 1e-08
  %v418 = vadd.f32 %v323, 1e-08
  %v419 = vmul.f32 %v413, %v416
  %v420 = vmul.f32 %v414, %v417
  %v421 = vmul.f32 %v415, %v418
  %v422 = vrcp.pop %v419
  %v423 = vmul.f32 %v373, %v422
  %v424 = vrcp.pop %v420
  %v425 = vmul.f32 %v387, %v424
  %v426 = vrcp.pop %v421
  %v427 = vmul.f32 %v412, %v426
  %v428 = vmul.f32 %v199, %v309
  %v429 = vmul.f32 %v206, %v316
  %v430 = vmul.f32 %v213, %v323
  %v431 = vmul.f32 %v428, %v422
  %v432 = vmul.f32 %v429, %v424
  %v433 = vmul.f32 %v430, %v426
  %v434 = vmax.f32 %v431, 1e-08
  %v435 = vmax.f32 %v432, 1e-08
  %v436 = vmax.f32 %v433, 1e-08
  %v437 = vrcp.pop %v434
  %v438 = vmul.f32 %v423, %v437
  %v439 = vrcp.pop %v435
  %v440 = vmul.f32 %v425, %v439
  %v441 = vrcp.pop %v436
  %v442 = vmul.f32 %v427, %v441
  %s443 = smul.u32 0, 18
  %v444 = vlaneseq
  %v445 = vshrl.u32 %v444, 7
  %v446 = vadd.s32 %v445, 8
  %v447 = vadd.s32 %v445, 16
  %v448 = vstv %s443
  %v449 = vadd.s32 %v448, %v445
  %v450 = vadd.s32 %v448, %v446
  %v451 = vadd.s32 %v448, %v447
  %vm452 = vcmp.lt.s32.totalorder %v449, 18
  %vm453 = vcmp.lt.s32.totalorder %v450, 18
  %vm454 = vcmp.lt.s32.totalorder %v451, 18
  %v455 = vsel %vm452, %v438, 0.0
  %v456 = vsel %vm453, %v440, 0.0
  %v457 = vsel %vm454, %v442, 0.0
  %vm458 = vcmask 7168
  %v459 = vsel %vm458, %v455, 0.0
  %v460 = vsel %vm458, %v456, 0.0
  %v461 = vadd.f32 %v459, %v460
  %vm462 = vcmask 1024
  %v463 = vsel %vm462, %v457, 0.0
  %v464 = vadd.f32 %v461, %v463
  %465 = vadd.xlane.f32.xlu0 %v464
  %v466 = vpop.xlane.xlu0 %465
  %v467 = vrot.slane %v466, 4
  %v468 = vadd.f32 %v466, %v467
  %v469 = vrot.slane %v468, 2
  %v470 = vadd.f32 %v468, %v469
  %v471 = vrot.slane %v470, 1
  %v472 = vadd.f32 %v470, %v471
  %s473 = vtos %v472
  %v474 = vstv %s473
  %475 = vst [vmem:[%s2] sm:$0xff] %v474
  // Predicated region
  $region10: #{train_loss_discrete.3} parent=0 // pred_check
    _
  $region11: #{train_loss_discrete.3} parent=0 // pred_check_branch
    %477 = sbr.rel (0) target = $region13
  $region12: #{train_loss_discrete.3} parent=0 // pred_region
    _
  $region13: #{train_loss_discrete.3} parent=0 // pred_fallthru
    _
  // Predicated region
  $region14: #{train_loss_discrete.3} parent=0 // pred_check
    _
  $region15: #{train_loss_discrete.3} parent=0 // pred_check_branch
    %479 = sbr.rel (0) target = $region17
  $region16: #{train_loss_discrete.3} parent=0 // pred_region
    _
  $region17: #{train_loss_discrete.3} parent=0 // pred_fallthru
    _

</llo_original>
